<compile_context>
chip_gen: v6e
topology: v6e:2x2x1
jax: 0.10.0
libtpu: 0.0.40
codegen_flags: <defaults>
</compile_context>

<pallas_src>
import functools

import jax
import jax.numpy as jnp
from jax import lax
from jax.experimental import pallas as pl
from jax.experimental.pallas import tpu as pltpu


def _actpkn_kernel(cp_ref, x_ref, o_ref, *, dp):
    # cp_ref is a (1,)-shaped scalar parameter living in SMEM.
    cp = cp_ref[0]
    v = x_ref[...] + cp
    if isinstance(dp, int):
        o_ref[...] = lax.integer_pow(v, dp)
    else:
        o_ref[...] = v ** dp


def _choose_lanes(total: int):
    """Pick a lane-dense last dim (multiple of 128) for the flattened array."""
    for cand in (1024, 512, 256, 128):
        if total % cand == 0:
            return cand, False
    return 128, True  # needs padding


def actpkn_forward(x: jax.Array, cp, dp: int = 2) -> jax.Array:
    """Elementwise (x + cp) ** dp via a tiled, lane-dense Pallas TPU kernel."""
    orig_shape = x.shape
    dtype = x.dtype
    total = x.size
    itemsize = jnp.dtype(dtype).itemsize

    lanes, needs_pad = _choose_lanes(total)
    xf = x.reshape(-1)
    if needs_pad:
        rows = pl.cdiv(total, lanes)
        xf = jnp.pad(xf, (0, rows * lanes - total))
    else:
        rows = total // lanes
    x2d = xf.reshape(rows, lanes)

    # Row-tile size: ~2 MiB per block buffer, multiple of 8 sublanes.
    # With one input + one output, each double-buffered, peak VMEM for the
    # pipeline is <= 4 * 2 MiB = 8 MiB -> safe on every generation (incl. v7x).
    target_bytes = 2 * 1024 * 1024
    tile_r = max(8, (target_bytes // (lanes * itemsize)) // 8 * 8)
    if rows <= tile_r:
        tile_r = rows  # full extent is always a legal block dim
    grid = (pl.cdiv(rows, tile_r),)

    cp_arr = jnp.asarray(cp, dtype=dtype).reshape((1,))

    out2d = pl.pallas_call(
        functools.partial(_actpkn_kernel, dp=dp),
        out_shape=jax.ShapeDtypeStruct((rows, lanes), dtype),
        grid_spec=pl.GridSpec(
            grid=grid,
            in_specs=[
                pl.BlockSpec(memory_space=pltpu.MemorySpace.SMEM),  # cp scalar
                pl.BlockSpec((tile_r, lanes), lambda i: (i, 0)),    # x tile
            ],
            out_specs=pl.BlockSpec((tile_r, lanes), lambda i: (i, 0)),
        ),
        compiler_params=pltpu.CompilerParams(
            dimension_semantics=("parallel",),       # shard tiles on v7x's 2 TCs
            vmem_limit_bytes=32 * 1024 * 1024,       # explicit, fits all chips
        ),
    )(cp_arr, x2d)

    out = out2d.reshape(-1)
    if needs_pad:
        out = out[:total]
    return out.reshape(orig_shape)


if __name__ == "__main__":
    # Deterministic parameters (matches ActPKN(cp=1.0, dp=2, dropout=False)).
    cp_param = jnp.float32(1.0)
    dp_param = 2
    # TODO(synk): dropout branch (torch.nn.Dropout) is training-mode stochastic;
    # module default is dropout=False so it is not applied here.

    key = jax.random.PRNGKey(0)

    # Primary small-shape check (module-typical NCHW activation).
    x = jax.random.normal(key, (2, 4, 16, 16), dtype=jnp.float32)
    out = jax.block_until_ready(actpkn_forward(x, cp_param, dp=dp_param))
    ref = (x + cp_param) ** dp_param
    assert out.shape == x.shape
    assert jnp.allclose(out, ref, atol=1e-6, rtol=1e-6), "mismatch vs reference"

    # Secondary check: exercises the multi-tile grid and the partial last
    # row-block path (rows > tile_r, rows % tile_r != 0).
    x_big = jax.random.normal(key, (8, 64, 40, 40), dtype=jnp.float32)
    out_big = jax.block_until_ready(actpkn_forward(x_big, cp_param, dp=dp_param))
    ref_big = (x_big + cp_param) ** dp_param
    assert jnp.allclose(out_big, ref_big, atol=1e-6, rtol=1e-6), "mismatch (tiled)"

    # Tertiary check: exercises the non-128-divisible padding fallback.
    x_odd = jax.random.normal(key, (1, 3, 5, 7), dtype=jnp.float32)
    out_odd = jax.block_until_ready(actpkn_forward(x_odd, cp_param, dp=dp_param))
    ref_odd = (x_odd + cp_param) ** dp_param
    assert jnp.allclose(out_odd, ref_odd, atol=1e-6, rtol=1e-6), "mismatch (padded)"

    print("KERNEL_OK")
</pallas_src>

<mosaic_0001>
module attributes {stable_mosaic.version = 11 : i64} {
  func.func @_actpkn_kernel(%arg0: i32, %arg1: memref<1xf32, #tpu.memory_space<smem>>, %arg2: memref<2x1024xf32, #tpu.memory_space<vmem>>, %arg3: memref<2x1024xf32, #tpu.memory_space<vmem>>) attributes {dimension_semantics = [#tpu.dimension_semantics<parallel>], iteration_bounds = array<i64: 1>, scalar_prefetch = 0 : i64, scratch_operands = 0 : i64, tpu.core_type = #tpu.core_type<tc>, window_params = [{transform_indices = @transform_0, window_bounds = array<i64: 1>}, {transform_indices = @transform_1, window_bounds = array<i64: 2, 1024>}, {transform_indices = @transform_2, window_bounds = array<i64: 2, 1024>}]} {
    %c0 = arith.constant 0 : index
    %0 = memref.load %arg1[%c0] : memref<1xf32, #tpu.memory_space<smem>>
    %c0_0 = arith.constant 0 : index
    %c0_1 = arith.constant 0 : index
    %1 = vector.load %arg2[%c0_0, %c0_1] : memref<2x1024xf32, #tpu.memory_space<vmem>>, vector<2x1024xf32>
    %2 = vector.broadcast %0 : f32 to vector<2x1024xf32>
    %3 = arith.addf %1, %2 : vector<2x1024xf32>
    %4 = arith.mulf %3, %3 : vector<2x1024xf32>
    %c0_2 = arith.constant 0 : index
    %c0_3 = arith.constant 0 : index
    %5 = vector.load %arg3[%c0_2, %c0_3] : memref<2x1024xf32, #tpu.memory_space<vmem>>, vector<2x1024xf32>
    tpu.vector_store %arg3[%c0_2, %c0_3], %4 {strides = array<i32>} : memref<2x1024xf32, #tpu.memory_space<vmem>>, vector<2x1024xf32>,
    return
  }
  func.func @transform_0(%arg0: i32) -> i32 {
    %c0_i32 = arith.constant 0 : i32
    %c0_i32_0 = arith.constant 0 : i32
    return %c0_i32 : i32
  }
  func.func @transform_1(%arg0: i32) -> (i32, i32) {
    %c0_i32 = arith.constant 0 : i32
    %c0_i32_0 = arith.constant 0 : i32
    return %arg0, %c0_i32 : i32, i32
  }
  func.func @transform_2(%arg0: i32) -> (i32, i32) {
    %c0_i32 = arith.constant 0 : i32
    %c0_i32_0 = arith.constant 0 : i32
    return %arg0, %c0_i32 : i32, i32
  }
}

</mosaic_0001>

<llo_original>
// kernel: tpu_custom_call.1
$region0: #{tpu_custom_call.1}
  #allocation0 [shape = 'u32[]', space=smem, size = 0x4, offset = 0x4, fixed_abs, tag = 'smem constant byte address 0x4 - core index']
  #allocation1 [shape = 'u32[144,128]{1,0:T(1,128)}', space=vmem, size = 0x12000, scoped, tag = 'internal scratch']
  #allocation2 [shape = 'f32[1]{0:T(128)S(6)}', space=smem, size = 0x200, scoped, tag = 'scoped memory for tpu_custom_call.1']
  %s0 = inlined_call_operand.<no memory space> [shape: f32[1], index: 0, kind: input, shape index: {}]
  %s1 = inlined_call_operand.hbm [shape: f32[2,1024], index: 1, kind: input, shape index: {}]
  %s2 = inlined_call_operand.hbm [shape: f32[2,1024], index: 2, kind: output, shape index: {}]
  %s3 = sld [smem:[#allocation0]]
  $region22: #{tpu_custom_call.1} parent=0
    _
  %s5 = ssub.s32 1, %s3
  %s6 = scalar_select 0, %s5, %s3
  %7 = sst [smem:[#allocation2]] %s0
  $region1: #{tpu_custom_call.1} parent=0
    #allocation3 [shape = 'u8[8192]{0}', space=vmem, size = 0x2000, scoped, tag = 'input window, operand 1, single buffered']
    #allocation4 [shape = 's32[1]{0}', space=sflag, size = 0x4, scoped, tag = 'scoped memory for tpu_custom_call.1']
    #allocation5 [shape = 's32[1]{0}', space=sflag, size = 0x4, scoped, tag = 'scoped memory for tpu_custom_call.1']
    #allocation6 [shape = 'u8[8192]{0}', space=vmem, size = 0x2000, scoped, tag = 'output window, operand 0, single buffered']
    %8 = vsyncpa [#allocation4], 0
    %9 = vsyncpa [#allocation5], 0
    // Predicated region
    $region2: #{tpu_custom_call.1} parent=1 // pred_check
      _
    $region3: #{tpu_custom_call.1} parent=1 // pred_check_branch
      %11 = sbr.rel (0) target = $region5
    $region4: #{tpu_custom_call.1} parent=1 // pred_region
      _
    $region5: #{tpu_custom_call.1} parent=1 // pred_fallthru
      _
    // Predicated region
    $region6: #{tpu_custom_call.1} parent=1 // pred_check
      _
    $region7: #{tpu_custom_call.1} parent=1 // pred_check_branch
      %13 = sbr.rel (0) target = $region9
    $region8: #{tpu_custom_call.1} parent=1 // pred_region
      %s15 = ssub.s32 256, 256
      %16 = vsyncadd [#allocation4], %s15
      %s18 = sshll.u32 [#allocation3], 4
      %s19 = int_to_ptr.vmem [resolvable:$true] %s18
      %21 = dma.hbm_to_vmem [thread:$0]  %s1, 256, %s19, [#allocation4]
    $region9: #{tpu_custom_call.1} parent=1 // pred_fallthru
      _
    // Predicated region
    $region10: #{tpu_custom_call.1} parent=1 // pred_check
      _
    $region11: #{tpu_custom_call.1} parent=1 // pred_check_branch
      %23 = sbr.rel (0) target = $region13
    $region12: #{tpu_custom_call.1} parent=1 // pred_region
      %24 = dma.done [#allocation4], 256
    $region13: #{tpu_custom_call.1} parent=1 // pred_fallthru
      _
    %s25 = sld [smem:[#allocation2]]
    %v26 = vld [vmem:[#allocation3] sm:$0xff]
    %v27 = vld [vmem:[#allocation3 + $0x8] sm:$0xff]
    %v28 = vstv %s25
    %v29 = vadd.f32 %v26, %v28
    %v30 = vadd.f32 %v27, %v28
    %v31 = vmul.f32 %v29, %v29
    %v32 = vmul.f32 %v30, %v30
    %33 = vst [vmem:[#allocation6] sm:$0xff] %v31
    %34 = vst [vmem:[#allocation6 + $0x8] sm:$0xff] %v32
    // Predicated region
    $region14: #{tpu_custom_call.1} parent=1 // pred_check
      _
    $region15: #{tpu_custom_call.1} parent=1 // pred_check_branch
      %36 = sbr.rel (0) target = $region17
    $region16: #{tpu_custom_call.1} parent=1 // pred_region
      %s38 = ssub.s32 256, 256
      %39 = vsyncadd [#allocation5], %s38
      %s41 = sshll.u32 [#allocation6], 4
      %s42 = int_to_ptr.vmem [resolvable:$true] %s41
      %44 = dma.vmem_to_hbm [thread:$0]  %s42, 256, %s2, [#allocation5]
    $region17: #{tpu_custom_call.1} parent=1 // pred_fallthru
      _
    // Predicated region
    $region18: #{tpu_custom_call.1} parent=1 // pred_check
      _
    $region19: #{tpu_custom_call.1} parent=1 // pred_check_branch
      %46 = sbr.rel (0) target = $region21
    $region20: #{tpu_custom_call.1} parent=1 // pred_region
      %47 = dma.done [#allocation5], 256
    $region21: #{tpu_custom_call.1} parent=1 // pred_fallthru
      _
    %48 = vsyncpa [#allocation4], 1
    %49 = vsyncpa [#allocation5], 1

</llo_original>
